<compile_context>
chip_gen: v5e
topology: v5e:2x2
jax: 0.10.0
libtpu: 0.0.40
codegen_flags: <defaults>
</compile_context>

<pallas_src>
import functools

import jax
import jax.numpy as jnp
from jax.experimental import pallas as pl
from jax.experimental.pallas import tpu as pltpu


def _conv_len(l_in, kernel, stride):
    return (l_in - kernel) // stride + 1


def _row_ds(start, size, stride):
    if stride == 1:
        return pl.ds(start, size)
    return pl.ds(start, size, stride)


def _layer_into_next_patches(src_ref, w, b, dst_ref, *, item_len_in,
                             item_len_out, k_next, s_next, bblk, c_out,
                             operand_dtype):
    """Apply one conv layer (input already in im2col form in `src_ref`) and
    scatter its bias+ReLU output directly into the NEXT layer's im2col buffer.

      src_ref : (bblk * item_len_in,  K_cur * C_prev)  this layer's patch rows
      dst_ref : (bblk * item_len_out, k_next * c_out)  next layer's patch rows

    For next-layer tap k the rows needed are {m * s_next + k}.  When the item
    pitch equals s_next * item_len_out (always true here for kernel==stride
    with evenly dividing lengths) a single strided read covers all folded
    batch items at once; otherwise we fall back to per-item strided reads.
    """
    folded = (item_len_in == s_next * item_len_out)
    for k in range(k_next):
        if folded:
            rows = src_ref[_row_ds(k, bblk * item_len_out, s_next), :]
            h = jnp.dot(rows.astype(operand_dtype), w,
                        preferred_element_type=jnp.float32)
            h = jnp.maximum(h + b, 0.0)
            dst_ref[:, k * c_out:(k + 1) * c_out] = h.astype(dst_ref.dtype)
        else:
            for i in range(bblk):
                rows = src_ref[_row_ds(i * item_len_in + k, item_len_out,
                                       s_next), :]
                h = jnp.dot(rows.astype(operand_dtype), w,
                            preferred_element_type=jnp.float32)
                h = jnp.maximum(h + b, 0.0)
                dst_ref[i * item_len_out:(i + 1) * item_len_out,
                        k * c_out:(k + 1) * c_out] = h.astype(dst_ref.dtype)


# ----------------------------------------------------------------------------
# Fused encoder forward: one pallas_call for all four conv+ReLU stages.
# ----------------------------------------------------------------------------
def encoder_forward(packed_params, x, *, kernel_size, stride_size,
                    block_batch=None):
    """x: (B, C_in, L) NCL float -> (B, embedding_dim, L_out) NCL float32."""
    x = x.astype(jnp.float32)
    B, c_in, L = x.shape

    w1, b1 = packed_params["conv1"]   # (4*C_in, H), (1, H)
    w2, b2 = packed_params["conv2"]   # (4*H,   H), (1, H)
    w5, b5 = packed_params["conv5"]   # (ks*H,  H), (1, H)
    w6, b6 = packed_params["conv6"]   # (ks*H,  E), (1, E)
    hidden = b1.shape[1]
    emb = b6.shape[1]
    operand_dtype = w1.dtype          # f32 or bf16 (set at weight packing time)

    # Static per-layer output lengths (PyTorch floor conv arithmetic).
    l1 = _conv_len(L, 4, 4)
    l2 = _conv_len(l1, 4, 4)
    l3 = _conv_len(l2, kernel_size, stride_size)
    l4 = _conv_len(l3, kernel_size, stride_size)
    assert l4 >= 1, "input too short for this encoder configuration"

    if block_batch is None:
        # Fold batch into the matmul M dim, but keep >= 2 grid steps when
        # possible so both v7x TensorCores get work ("parallel" axis).
        block_batch = B // 2 if (B >= 2 and B % 2 == 0) else 1
    assert B % block_batch == 0
    bblk = block_batch
    g = B // bblk

    # conv1 has kernel == stride == 4, so its im2col is a pure transpose +
    # contiguous reshape (one tiny XLA pass; could be folded in-kernel at
    # production sizes).  Patch row (b, m) = [x[b, :, 4m+k] for k in 0..3],
    # tap-major / channel-minor, matching the packed weight row order.
    p1w = 4 * c_in
    x_nlc = jnp.transpose(x, (0, 2, 1))[:, : l1 * 4, :]
    x_p = x_nlc.reshape(g, bblk * l1, p1w)

    def kernel(xp_ref, w1_ref, b1_ref, w2_ref, b2_ref, w5_ref, b5_ref,
               w6_ref, b6_ref, o_ref, p2_ref, p5_ref, p6_ref):
        # conv1 + ReLU -> written straight into conv2's im2col buffer.
        _layer_into_next_patches(
            xp_ref, w1_ref[...], b1_ref[...], p2_ref,
            item_len_in=l1, item_len_out=l2, k_next=4, s_next=4,
            bblk=bblk, c_out=hidden, operand_dtype=operand_dtype)
        # conv2 + ReLU (+ dropout(0.2) == identity, eval) -> conv5's buffer.
        _layer_into_next_patches(
            p2_ref, w2_ref[...], b2_ref[...], p5_ref,
            item_len_in=l2, item_len_out=l3, k_next=kernel_size,
            s_next=stride_size, bblk=bblk, c_out=hidden,
            operand_dtype=operand_dtype)
        # conv5 + ReLU -> conv6's buffer.
        _layer_into_next_patches(
            p5_ref, w5_ref[...], b5_ref[...], p6_ref,
            item_len_in=l3, item_len_out=l4, k_next=kernel_size,
            s_next=stride_size, bblk=bblk, c_out=hidden,
            operand_dtype=operand_dtype)
        # conv6 + ReLU (reference applies ReLU here too): one matmul + store.
        h = jnp.dot(p6_ref[...].astype(operand_dtype), w6_ref[...],
                    preferred_element_type=jnp.float32)
        o_ref[...] = jnp.maximum(h + b6_ref[...], 0.0).astype(o_ref.dtype)

    out = pl.pallas_call(
        kernel,
        out_shape=jax.ShapeDtypeStruct((g, bblk * l4, emb), jnp.float32),
        grid=(g,),
        in_specs=[
            pl.BlockSpec((None, bblk * l1, p1w), lambda i: (i, 0, 0)),
            pl.BlockSpec(w1.shape, lambda i: (0, 0)),   # weights: constant index
            pl.BlockSpec(b1.shape, lambda i: (0, 0)),   # -> stay VMEM resident
            pl.BlockSpec(w2.shape, lambda i: (0, 0)),
            pl.BlockSpec(b2.shape, lambda i: (0, 0)),
            pl.BlockSpec(w5.shape, lambda i: (0, 0)),
            pl.BlockSpec(b5.shape, lambda i: (0, 0)),
            pl.BlockSpec(w6.shape, lambda i: (0, 0)),
            pl.BlockSpec(b6.shape, lambda i: (0, 0)),
        ],
        out_specs=pl.BlockSpec((None, bblk * l4, emb), lambda i: (i, 0, 0)),
        scratch_shapes=[
            pltpu.VMEM((bblk * l2, 4 * hidden), jnp.float32),            # conv2 patches
            pltpu.VMEM((bblk * l3, kernel_size * hidden), jnp.float32),  # conv5 patches
            pltpu.VMEM((bblk * l4, kernel_size * hidden), jnp.float32),  # conv6 patches
        ],
        compiler_params=pltpu.CompilerParams(
            dimension_semantics=("parallel",)),
    )(x_p, w1, b1, w2, b2, w5, b5, w6, b6)

    # (g, bblk*l4, emb) -> (B, l4, emb) is a free reshape; transpose back to
    # NCL for PyTorch API parity (tiny pass at these sizes).
    out = out.reshape(B, l4, emb)
    return jnp.transpose(out, (0, 2, 1))


# ----------------------------------------------------------------------------
# Parameters: PyTorch-style init + one-time packing into the kernel layout.
# ----------------------------------------------------------------------------
def init_encoder_params(key, input_dim, hidden_dim, embedding_dim,
                        kernel_size, stride_size):
    """Deterministic synthetic parameters (PyTorch-like uniform fan-in init),
    stored in the PyTorch Conv1d layout (C_out, C_in, K)."""
    def conv_init(k, c_out, c_in, ksz):
        k_w, k_b = jax.random.split(k)
        bound = 1.0 / jnp.sqrt(c_in * ksz)
        w = jax.random.uniform(k_w, (c_out, c_in, ksz), jnp.float32, -bound, bound)
        b = jax.random.uniform(k_b, (c_out,), jnp.float32, -bound, bound)
        return w, b

    k1, k2, k5, k6 = jax.random.split(key, 4)
    return {
        "conv1": conv_init(k1, hidden_dim, input_dim, 4),
        "conv2": conv_init(k2, hidden_dim, hidden_dim, 4),
        "conv5": conv_init(k5, hidden_dim, hidden_dim, kernel_size),
        "conv6": conv_init(k6, embedding_dim, hidden_dim, kernel_size),
    }


def pack_encoder_params(params, operand_dtype=jnp.float32):
    """One-time repack (outside the jitted step) into the kernel layout:
    weight (C_out, C_in, K) -> (K*C_in, C_out) tap-major; bias -> (1, C_out).
    `operand_dtype=jnp.bfloat16` enables full-rate MXU on v6e/v7x (f32 accum)."""
    packed = {}
    for name, (w, b) in params.items():
        c_out = w.shape[0]
        w_t = jnp.transpose(w, (2, 1, 0)).reshape(-1, c_out).astype(operand_dtype)
        packed[name] = (w_t, b.reshape(1, c_out).astype(jnp.float32))
    return packed


# ----------------------------------------------------------------------------
# Pure-JAX reference (XLA convs) for correctness checks.
# ----------------------------------------------------------------------------
def _reference_forward(params, x, kernel_size, stride_size):
    def conv_relu(x, w, b, stride):
        y = jax.lax.conv_general_dilated(
            x, w, window_strides=(stride,), padding="VALID",
            dimension_numbers=("NCH", "OIH", "NCH"),
            precision=jax.lax.Precision.HIGHEST)
        return jax.nn.relu(y + b[None, :, None])

    x = x.astype(jnp.float32)
    w, b = params["conv1"]; x = conv_relu(x, w, b, 4)
    w, b = params["conv2"]; x = conv_relu(x, w, b, 4)
    # dropout: identity in eval mode
    w, b = params["conv5"]; x = conv_relu(x, w, b, stride_size)
    w, b = params["conv6"]; x = conv_relu(x, w, b, stride_size)
    return x


if __name__ == "__main__":
    def run_config(B, L, input_dim, hidden_dim, embedding_dim, kernel_size,
                   stride_size, operand_dtype, tol, seed=0):
        key = jax.random.PRNGKey(seed)
        k_params, k_x = jax.random.split(key)
        params = init_encoder_params(k_params, input_dim, hidden_dim,
                                     embedding_dim, kernel_size, stride_size)
        packed = pack_encoder_params(params, operand_dtype=operand_dtype)
        x = jax.random.normal(k_x, (B, input_dim, L), dtype=jnp.float32)

        fwd = jax.jit(functools.partial(
            encoder_forward, kernel_size=kernel_size, stride_size=stride_size))
        out = fwd(packed, x)
        jax.block_until_ready(out)

        ref = _reference_forward(params, x, kernel_size, stride_size)
        assert out.shape == ref.shape, (out.shape, ref.shape)
        assert out.dtype == jnp.float32
        assert bool(jnp.all(out >= 0.0))
        err = float(jnp.max(jnp.abs(out - ref)))
        assert err < tol, f"mismatch vs reference conv: max abs err {err}"
        return err

    # Main config: B=4 exercises batch folding (bblk=2, grid=(2,), both v7x
    # TCs busy); all layers have kernel==stride so every window gather is a
    # single folded strided read.  L: 128 -> 32 -> 8 -> 4 -> 2.
    run_config(B=4, L=128, input_dim=4, hidden_dim=32, embedding_dim=16,
               kernel_size=2, stride_size=2, operand_dtype=jnp.float32,
               tol=5e-2)
    # Same config with bf16 MXU operands (v6e/v7x recommendation); f32
    # accumulate/bias/ReLU, so only operand rounding error remains.
    run_config(B=4, L=128, input_dim=4, hidden_dim=32, embedding_dim=16,
               kernel_size=2, stride_size=2, operand_dtype=jnp.bfloat16,
               tol=2e-1)
    # General-path config (conv5/conv6: kernel=2, stride=1): exercises the
    # per-item strided-read fallback for kernel != stride.
    run_config(B=2, L=64, input_dim=4, hidden_dim=32, embedding_dim=16,
               kernel_size=2, stride_size=1, operand_dtype=jnp.float32,
               tol=5e-2)

    print("KERNEL_OK")
</pallas_src>

<mosaic_0001>
module attributes {stable_mosaic.version = 11 : i64} {
  func.func @kernel(%arg0: i32, %arg1: memref<1x64x16xf32, #tpu.memory_space<vmem>>, %arg2: memref<16x32xf32, #tpu.memory_space<vmem>>, %arg3: memref<1x32xf32, #tpu.memory_space<vmem>>, %arg4: memref<128x32xf32, #tpu.memory_space<vmem>>, %arg5: memref<1x32xf32, #tpu.memory_space<vmem>>, %arg6: memref<64x32xf32, #tpu.memory_space<vmem>>, %arg7: memref<1x32xf32, #tpu.memory_space<vmem>>, %arg8: memref<64x16xf32, #tpu.memory_space<vmem>>, %arg9: memref<1x16xf32, #tpu.memory_space<vmem>>, %arg10: memref<1x4x16xf32, #tpu.memory_space<vmem>>, %arg11: memref<16x128xf32, #tpu.memory_space<vmem>>, %arg12: memref<8x64xf32, #tpu.memory_space<vmem>>, %arg13: memref<4x64xf32, #tpu.memory_space<vmem>>) attributes {dimension_semantics = [#tpu.dimension_semantics<parallel>], iteration_bounds = array<i64: 2>, scalar_prefetch = 0 : i64, scratch_operands = 3 : i64, tpu.core_type = #tpu.core_type<tc>, window_params = [{transform_indices = @transform_0, window_bounds = array<i64: 1, 64, 16>}, {pipeline_mode = #tpu.pipeline_mode<synchronous>, transform_indices = @transform_1, window_bounds = array<i64: 16, 32>}, {pipeline_mode = #tpu.pipeline_mode<synchronous>, transform_indices = @transform_2, window_bounds = array<i64: 1, 32>}, {pipeline_mode = #tpu.pipeline_mode<synchronous>, transform_indices = @transform_3, window_bounds = array<i64: 128, 32>}, {pipeline_mode = #tpu.pipeline_mode<synchronous>, transform_indices = @transform_4, window_bounds = array<i64: 1, 32>}, {pipeline_mode = #tpu.pipeline_mode<synchronous>, transform_indices = @transform_5, window_bounds = array<i64: 64, 32>}, {pipeline_mode = #tpu.pipeline_mode<synchronous>, transform_indices = @transform_6, window_bounds = array<i64: 1, 32>}, {pipeline_mode = #tpu.pipeline_mode<synchronous>, transform_indices = @transform_7, window_bounds = array<i64: 64, 16>}, {pipeline_mode = #tpu.pipeline_mode<synchronous>, transform_indices = @transform_8, window_bounds = array<i64: 1, 16>}, {transform_indices = @transform_9, window_bounds = array<i64: 1, 4, 16>}]} {
    %c0 = arith.constant 0 : index
    %c0_0 = arith.constant 0 : index
    %0 = vector.load %arg2[%c0, %c0_0] : memref<16x32xf32, #tpu.memory_space<vmem>>, vector<16x32xf32>
    %c0_1 = arith.constant 0 : index
    %c0_2 = arith.constant 0 : index
    %1 = vector.load %arg3[%c0_1, %c0_2] : memref<1x32xf32, #tpu.memory_space<vmem>>, vector<1x32xf32>
    %c0_3 = arith.constant 0 : index
    %c0_4 = arith.constant 0 : index
    %c0_5 = arith.constant 0 : index
    %2 = tpu.strided_load %arg1[%c0_3, %c0_4, %c0_5] {strides = array<i32: 1, 4, 1>} : memref<1x64x16xf32, #tpu.memory_space<vmem>>, vector<1x16x16xf32>
    %3 = vector.shape_cast %2 : vector<1x16x16xf32> to vector<16x16xf32>
    %cst = arith.constant dense<0.000000e+00> : vector<16x32xf32>
    %4 = tpu.matmul %3, %0, %cst {dimension_numbers = #tpu.dot_dimension_numbers<[1], [0], [0], [1], [0, 0, 1, 1], [], []>} : vector<16x16xf32>, vector<16x32xf32>, vector<16x32xf32> -> vector<16x32xf32>
    %5 = vector.broadcast %1 : vector<1x32xf32> to vector<16x32xf32>
    %6 = arith.addf %4, %5 : vector<16x32xf32>
    %cst_6 = arith.constant 0.000000e+00 : f32
    %7 = vector.broadcast %cst_6 : f32 to vector<16x32xf32>
    %8 = arith.maximumf %6, %7 : vector<16x32xf32>
    %c0_7 = arith.constant 0 : index
    %c0_8 = arith.constant 0 : index
    %9 = vector.load %arg11[%c0_7, %c0_8] : memref<16x128xf32, #tpu.memory_space<vmem>>, vector<16x32xf32>
    tpu.vector_store %arg11[%c0_7, %c0_8], %8 {strides = array<i32>} : memref<16x128xf32, #tpu.memory_space<vmem>>, vector<16x32xf32>,
    %c0_9 = arith.constant 0 : index
    %c1 = arith.constant 1 : index
    %c0_10 = arith.constant 0 : index
    %10 = tpu.strided_load %arg1[%c0_9, %c1, %c0_10] {strides = array<i32: 1, 4, 1>} : memref<1x64x16xf32, #tpu.memory_space<vmem>>, vector<1x16x16xf32>
    %11 = vector.shape_cast %10 : vector<1x16x16xf32> to vector<16x16xf32>
    %cst_11 = arith.constant dense<0.000000e+00> : vector<16x32xf32>
    %12 = tpu.matmul %11, %0, %cst_11 {dimension_numbers = #tpu.dot_dimension_numbers<[1], [0], [0], [1], [0, 0, 1, 1], [], []>} : vector<16x16xf32>, vector<16x32xf32>, vector<16x32xf32> -> vector<16x32xf32>
    %13 = vector.broadcast %1 : vector<1x32xf32> to vector<16x32xf32>
    %14 = arith.addf %12, %13 : vector<16x32xf32>
    %cst_12 = arith.constant 0.000000e+00 : f32
    %15 = vector.broadcast %cst_12 : f32 to vector<16x32xf32>
    %16 = arith.maximumf %14, %15 : vector<16x32xf32>
    %c0_13 = arith.constant 0 : index
    %c32 = arith.constant 32 : index
    %17 = vector.load %arg11[%c0_13, %c32] : memref<16x128xf32, #tpu.memory_space<vmem>>, vector<16x32xf32>
    tpu.vector_store %arg11[%c0_13, %c32], %16 {strides = array<i32>} : memref<16x128xf32, #tpu.memory_space<vmem>>, vector<16x32xf32>,
    %c0_14 = arith.constant 0 : index
    %c2 = arith.constant 2 : index
    %c0_15 = arith.constant 0 : index
    %18 = tpu.strided_load %arg1[%c0_14, %c2, %c0_15] {strides = array<i32: 1, 4, 1>} : memref<1x64x16xf32, #tpu.memory_space<vmem>>, vector<1x16x16xf32>
    %19 = vector.shape_cast %18 : vector<1x16x16xf32> to vector<16x16xf32>
    %cst_16 = arith.constant dense<0.000000e+00> : vector<16x32xf32>
    %20 = tpu.matmul %19, %0, %cst_16 {dimension_numbers = #tpu.dot_dimension_numbers<[1], [0], [0], [1], [0, 0, 1, 1], [], []>} : vector<16x16xf32>, vector<16x32xf32>, vector<16x32xf32> -> vector<16x32xf32>
    %21 = vector.broadcast %1 : vector<1x32xf32> to vector<16x32xf32>
    %22 = arith.addf %20, %21 : vector<16x32xf32>
    %cst_17 = arith.constant 0.000000e+00 : f32
    %23 = vector.broadcast %cst_17 : f32 to vector<16x32xf32>
    %24 = arith.maximumf %22, %23 : vector<16x32xf32>
    %c0_18 = arith.constant 0 : index
    %c64 = arith.constant 64 : index
    %25 = vector.load %arg11[%c0_18, %c64] : memref<16x128xf32, #tpu.memory_space<vmem>>, vector<16x32xf32>
    tpu.vector_store %arg11[%c0_18, %c64], %24 {strides = array<i32>} : memref<16x128xf32, #tpu.memory_space<vmem>>, vector<16x32xf32>,
    %c0_19 = arith.constant 0 : index
    %c3 = arith.constant 3 : index
    %c0_20 = arith.constant 0 : index
    %26 = tpu.strided_load %arg1[%c0_19, %c3, %c0_20] {strides = array<i32: 1, 4, 1>} : memref<1x64x16xf32, #tpu.memory_space<vmem>>, vector<1x16x16xf32>
    %27 = vector.shape_cast %26 : vector<1x16x16xf32> to vector<16x16xf32>
    %cst_21 = arith.constant dense<0.000000e+00> : vector<16x32xf32>
    %28 = tpu.matmul %27, %0, %cst_21 {dimension_numbers = #tpu.dot_dimension_numbers<[1], [0], [0], [1], [0, 0, 1, 1], [], []>} : vector<16x16xf32>, vector<16x32xf32>, vector<16x32xf32> -> vector<16x32xf32>
    %29 = vector.broadcast %1 : vector<1x32xf32> to vector<16x32xf32>
    %30 = arith.addf %28, %29 : vector<16x32xf32>
    %cst_22 = arith.constant 0.000000e+00 : f32
    %31 = vector.broadcast %cst_22 : f32 to vector<16x32xf32>
    %32 = arith.maximumf %30, %31 : vector<16x32xf32>
    %c0_23 = arith.constant 0 : index
    %c96 = arith.constant 96 : index
    %33 = vector.load %arg11[%c0_23, %c96] : memref<16x128xf32, #tpu.memory_space<vmem>>, vector<16x32xf32>
    tpu.vector_store %arg11[%c0_23, %c96], %32 {strides = array<i32>} : memref<16x128xf32, #tpu.memory_space<vmem>>, vector<16x32xf32>,
    %c0_24 = arith.constant 0 : index
    %c0_25 = arith.constant 0 : index
    %34 = vector.load %arg4[%c0_24, %c0_25] : memref<128x32xf32, #tpu.memory_space<vmem>>, vector<128x32xf32>
    %c0_26 = arith.constant 0 : index
    %c0_27 = arith.constant 0 : index
    %35 = vector.load %arg5[%c0_26, %c0_27] : memref<1x32xf32, #tpu.memory_space<vmem>>, vector<1x32xf32>
    %c0_28 = arith.constant 0 : index
    %c0_29 = arith.constant 0 : index
    %36 = tpu.strided_load %arg11[%c0_28, %c0_29] {strides = array<i32: 2, 1>} : memref<16x128xf32, #tpu.memory_space<vmem>>, vector<8x128xf32>
    %cst_30 = arith.constant dense<0.000000e+00> : vector<8x32xf32>
    %37 = tpu.matmul %36, %34, %cst_30 {dimension_numbers = #tpu.dot_dimension_numbers<[1], [0], [0], [1], [0, 0, 1, 1], [], []>} : vector<8x128xf32>, vector<128x32xf32>, vector<8x32xf32> -> vector<8x32xf32>
    %38 = vector.broadcast %35 : vector<1x32xf32> to vector<8x32xf32>
    %39 = arith.addf %37, %38 : vector<8x32xf32>
    %cst_31 = arith.constant 0.000000e+00 : f32
    %40 = vector.broadcast %cst_31 : f32 to vector<8x32xf32>
    %41 = arith.maximumf %39, %40 : vector<8x32xf32>
    %c0_32 = arith.constant 0 : index
    %c0_33 = arith.constant 0 : index
    %42 = vector.load %arg12[%c0_32, %c0_33] : memref<8x64xf32, #tpu.memory_space<vmem>>, vector<8x32xf32>
    tpu.vector_store %arg12[%c0_32, %c0_33], %41 {strides = array<i32>} : memref<8x64xf32, #tpu.memory_space<vmem>>, vector<8x32xf32>,
    %c1_34 = arith.constant 1 : index
    %c0_35 = arith.constant 0 : index
    %43 = tpu.strided_load %arg11[%c1_34, %c0_35] {strides = array<i32: 2, 1>} : memref<16x128xf32, #tpu.memory_space<vmem>>, vector<8x128xf32>
    %cst_36 = arith.constant dense<0.000000e+00> : vector<8x32xf32>
    %44 = tpu.matmul %43, %34, %cst_36 {dimension_numbers = #tpu.dot_dimension_numbers<[1], [0], [0], [1], [0, 0, 1, 1], [], []>} : vector<8x128xf32>, vector<128x32xf32>, vector<8x32xf32> -> vector<8x32xf32>
    %45 = vector.broadcast %35 : vector<1x32xf32> to vector<8x32xf32>
    %46 = arith.addf %44, %45 : vector<8x32xf32>
    %cst_37 = arith.constant 0.000000e+00 : f32
    %47 = vector.broadcast %cst_37 : f32 to vector<8x32xf32>
    %48 = arith.maximumf %46, %47 : vector<8x32xf32>
    %c0_38 = arith.constant 0 : index
    %c32_39 = arith.constant 32 : index
    %49 = vector.load %arg12[%c0_38, %c32_39] : memref<8x64xf32, #tpu.memory_space<vmem>>, vector<8x32xf32>
    tpu.vector_store %arg12[%c0_38, %c32_39], %48 {strides = array<i32>} : memref<8x64xf32, #tpu.memory_space<vmem>>, vector<8x32xf32>,
    %c0_40 = arith.constant 0 : index
    %c0_41 = arith.constant 0 : index
    %50 = vector.load %arg6[%c0_40, %c0_41] : memref<64x32xf32, #tpu.memory_space<vmem>>, vector<64x32xf32>
    %c0_42 = arith.constant 0 : index
    %c0_43 = arith.constant 0 : index
    %51 = vector.load %arg7[%c0_42, %c0_43] : memref<1x32xf32, #tpu.memory_space<vmem>>, vector<1x32xf32>
    %c0_44 = arith.constant 0 : index
    %c0_45 = arith.constant 0 : index
    %52 = tpu.strided_load %arg12[%c0_44, %c0_45] {strides = array<i32: 2, 1>} : memref<8x64xf32, #tpu.memory_space<vmem>>, vector<4x64xf32>
    %cst_46 = arith.constant dense<0.000000e+00> : vector<4x32xf32>
    %53 = tpu.matmul %52, %50, %cst_46 {dimension_numbers = #tpu.dot_dimension_numbers<[1], [0], [0], [1], [0, 0, 1, 1], [], []>} : vector<4x64xf32>, vector<64x32xf32>, vector<4x32xf32> -> vector<4x32xf32>
    %54 = vector.broadcast %51 : vector<1x32xf32> to vector<4x32xf32>
    %55 = arith.addf %53, %54 : vector<4x32xf32>
    %cst_47 = arith.constant 0.000000e+00 : f32
    %56 = vector.broadcast %cst_47 : f32 to vector<4x32xf32>
    %57 = arith.maximumf %55, %56 : vector<4x32xf32>
    %c0_48 = arith.constant 0 : index
    %c0_49 = arith.constant 0 : index
    %58 = vector.load %arg13[%c0_48, %c0_49] : memref<4x64xf32, #tpu.memory_space<vmem>>, vector<4x32xf32>
    tpu.vector_store %arg13[%c0_48, %c0_49], %57 {strides = array<i32>} : memref<4x64xf32, #tpu.memory_space<vmem>>, vector<4x32xf32>,
    %c1_50 = arith.constant 1 : index
    %c0_51 = arith.constant 0 : index
    %59 = tpu.strided_load %arg12[%c1_50, %c0_51] {strides = array<i32: 2, 1>} : memref<8x64xf32, #tpu.memory_space<vmem>>, vector<4x64xf32>
    %cst_52 = arith.constant dense<0.000000e+00> : vector<4x32xf32>
    %60 = tpu.matmul %59, %50, %cst_52 {dimension_numbers = #tpu.dot_dimension_numbers<[1], [0], [0], [1], [0, 0, 1, 1], [], []>} : vector<4x64xf32>, vector<64x32xf32>, vector<4x32xf32> -> vector<4x32xf32>
    %61 = vector.broadcast %51 : vector<1x32xf32> to vector<4x32xf32>
    %62 = arith.addf %60, %61 : vector<4x32xf32>
    %cst_53 = arith.constant 0.000000e+00 : f32
    %63 = vector.broadcast %cst_53 : f32 to vector<4x32xf32>
    %64 = arith.maximumf %62, %63 : vector<4x32xf32>
    %c0_54 = arith.constant 0 : index
    %c32_55 = arith.constant 32 : index
    %65 = vector.load %arg13[%c0_54, %c32_55] : memref<4x64xf32, #tpu.memory_space<vmem>>, vector<4x32xf32>
    tpu.vector_store %arg13[%c0_54, %c32_55], %64 {strides = array<i32>} : memref<4x64xf32, #tpu.memory_space<vmem>>, vector<4x32xf32>,
    %c0_56 = arith.constant 0 : index
    %c0_57 = arith.constant 0 : index
    %66 = vector.load %arg13[%c0_56, %c0_57] : memref<4x64xf32, #tpu.memory_space<vmem>>, vector<4x64xf32>
    %c0_58 = arith.constant 0 : index
    %c0_59 = arith.constant 0 : index
    %67 = vector.load %arg8[%c0_58, %c0_59] : memref<64x16xf32, #tpu.memory_space<vmem>>, vector<64x16xf32>
    %cst_60 = arith.constant dense<0.000000e+00> : vector<4x16xf32>
    %68 = tpu.matmul %66, %67, %cst_60 {dimension_numbers = #tpu.dot_dimension_numbers<[1], [0], [0], [1], [0, 0, 1, 1], [], []>} : vector<4x64xf32>, vector<64x16xf32>, vector<4x16xf32> -> vector<4x16xf32>
    %c0_61 = arith.constant 0 : index
    %c0_62 = arith.constant 0 : index
    %69 = vector.load %arg9[%c0_61, %c0_62] : memref<1x16xf32, #tpu.memory_space<vmem>>, vector<1x16xf32>
    %70 = vector.broadcast %69 : vector<1x16xf32> to vector<4x16xf32>
    %71 = arith.addf %68, %70 : vector<4x16xf32>
    %cst_63 = arith.constant 0.000000e+00 : f32
    %72 = vector.broadcast %cst_63 : f32 to vector<4x16xf32>
    %73 = arith.maximumf %71, %72 : vector<4x16xf32>
    %c0_64 = arith.constant 0 : index
    %c0_65 = arith.constant 0 : index
    %c0_66 = arith.constant 0 : index
    %74 = vector.load %arg10[%c0_64, %c0_65, %c0_66] : memref<1x4x16xf32, #tpu.memory_space<vmem>>, vector<1x4x16xf32>
    %75 = vector.shape_cast %74 : vector<1x4x16xf32> to vector<4x16xf32>
    %76 = vector.shape_cast %73 : vector<4x16xf32> to vector<1x4x16xf32>
    tpu.vector_store %arg10[%c0_64, %c0_65, %c0_66], %76 {strides = array<i32>} : memref<1x4x16xf32, #tpu.memory_space<vmem>>, vector<1x4x16xf32>,
    return
  }
  func.func @transform_0(%arg0: i32) -> (i32, i32, i32) {
    %c0_i32 = arith.constant 0 : i32
    %c0_i32_0 = arith.constant 0 : i32
    %c0_i32_1 = arith.constant 0 : i32
    return %arg0, %c0_i32, %c0_i32_0 : i32, i32, i32
  }
  func.func @transform_1(%arg0: i32) -> (i32, i32) {
    %c0_i32 = arith.constant 0 : i32
    %c0_i32_0 = arith.constant 0 : i32
    %c0_i32_1 = arith.constant 0 : i32
    return %c0_i32, %c0_i32_0 : i32, i32
  }
  func.func @transform_2(%arg0: i32) -> (i32, i32) {
    %c0_i32 = arith.constant 0 : i32
    %c0_i32_0 = arith.constant 0 : i32
    %c0_i32_1 = arith.constant 0 : i32
    return %c0_i32, %c0_i32_0 : i32, i32
  }
  func.func @transform_3(%arg0: i32) -> (i32, i32) {
    %c0_i32 = arith.constant 0 : i32
    %c0_i32_0 = arith.constant 0 : i32
    %c0_i32_1 = arith.constant 0 : i32
    return %c0_i32, %c0_i32_0 : i32, i32
  }
  func.func @transform_4(%arg0: i32) -> (i32, i32) {
    %c0_i32 = arith.constant 0 : i32
    %c0_i32_0 = arith.constant 0 : i32
    %c0_i32_1 = arith.constant 0 : i32
    return %c0_i32, %c0_i32_0 : i32, i32
  }
  func.func @transform_5(%arg0: i32) -> (i32, i32) {
    %c0_i32 = arith.constant 0 : i32
    %c0_i32_0 = arith.constant 0 : i32
    %c0_i32_1 = arith.constant 0 : i32
    return %c0_i32, %c0_i32_0 : i32, i32
  }
  func.func @transform_6(%arg0: i32) -> (i32, i32) {
    %c0_i32 = arith.constant 0 : i32
    %c0_i32_0 = arith.constant 0 : i32
    %c0_i32_1 = arith.constant 0 : i32
    return %c0_i32, %c0_i32_0 : i32, i32
  }
  func.func @transform_7(%arg0: i32) -> (i32, i32) {
    %c0_i32 = arith.constant 0 : i32
    %c0_i32_0 = arith.constant 0 : i32
    %c0_i32_1 = arith.constant 0 : i32
    return %c0_i32, %c0_i32_0 : i32, i32
  }
  func.func @transform_8(%arg0: i32) -> (i32, i32) {
    %c0_i32 = arith.constant 0 : i32
    %c0_i32_0 = arith.constant 0 : i32
    %c0_i32_1 = arith.constant 0 : i32
    return %c0_i32, %c0_i32_0 : i32, i32
  }
  func.func @transform_9(%arg0: i32) -> (i32, i32, i32) {
    %c0_i32 = arith.constant 0 : i32
    %c0_i32_0 = arith.constant 0 : i32
    %c0_i32_1 = arith.constant 0 : i32
    return %arg0, %c0_i32, %c0_i32_0 : i32, i32, i32
  }
}

</mosaic_0001>

<llo_original>
// kernel: encoder_forward.1
$region0: #{encoder_forward.1}
  #allocation0 [shape = 'u32[]', space=smem, size = 0x4, offset = 0x4, fixed_abs, tag = 'smem constant byte address 0x4 - core index']
  #allocation1 [shape = 'u32[72,128]{1,0:T(1,128)}', space=vmem, size = 0x9000, scoped, tag = 'internal scratch']
  #allocation2 [shape = 'f32[16,128]{1,0:T(8,128)}', space=vmem, size = 0x2000, scoped, tag = 'scratch operand']
  #allocation3 [shape = 'f32[8,64]{1,0:T(8,128)}', space=vmem, size = 0x1000, scoped, tag = 'scratch operand']
  #allocation4 [shape = 'f32[4,64]{1,0:T(4,128)}', space=vmem, size = 0x800, scoped, tag = 'scratch operand']
  %s0 = inlined_call_operand.vmem [shape: f32[2,64,16], index: 0, kind: input, shape index: {}]
  %s1 = inlined_call_operand.vmem [shape: f32[16,32], index: 1, kind: input, shape index: {}]
  %s2 = inlined_call_operand.vmem [shape: f32[1,32], index: 2, kind: input, shape index: {}]
  %s3 = inlined_call_operand.vmem [shape: f32[128,32], index: 3, kind: input, shape index: {}]
  %s4 = inlined_call_operand.vmem [shape: f32[1,32], index: 4, kind: input, shape index: {}]
  %s5 = inlined_call_operand.vmem [shape: f32[64,32], index: 5, kind: input, shape index: {}]
  %s6 = inlined_call_operand.vmem [shape: f32[1,32], index: 6, kind: input, shape index: {}]
  %s7 = inlined_call_operand.vmem [shape: f32[64,16], index: 7, kind: input, shape index: {}]
  %s8 = inlined_call_operand.vmem [shape: f32[1,16], index: 8, kind: input, shape index: {}]
  %s9 = inlined_call_operand.hbm [shape: f32[2,4,16], index: 9, kind: output, shape index: {}]
  %s10 = sld [smem:[#allocation0]]
  $region69: #{encoder_forward.1} parent=0
    _
  %s12 = ssub.s32 1, %s10
  %s13 = scalar_select 0, %s12, %s10
  $region1: #{encoder_forward.1} parent=0
    #allocation5 [shape = 'u8[4096]{0}', space=vmem, size = 0x1000, scoped, tag = 'output window, operand 0']
    #allocation6 [shape = 's32[2]{0}', space=sflag, size = 0x8, scoped, tag = 'scoped memory for encoder_forward.1']
    %14 = vsyncpa [#allocation6], 0
    %s15 = scalar_lea.sflag [#allocation6], 1
    %16 = vsyncpa %s15, 0
    loop: start=0, step=1, limit=4
    $region2: #{encoder_forward.1} parent=1 // loop_pre_header
      _
    $region3: #{encoder_forward.1} parent=1 // loop_header
      %s18 = sphi 0, %s22
      %p19 = scmp.ge.s32.totalorder %s18, 4
      %s28 = sphi 0, %s30
      %s31 = sphi 0, %s28
      %s32 = sphi 0, %s31
      %s48 = sphi 0, %s32
      %s52 = sphi 0, %s52
      %s54 = sphi 0, %s52
      %s55 = sphi 0, %s54
      %s69 = sphi 0, %s55
      %s73 = sphi 0, %s73
      %s75 = sphi 0, %s73
      %s76 = sphi 0, %s75
      %s90 = sphi 0, %s76
      %s94 = sphi 0, %s94
      %s96 = sphi 0, %s94
      %s97 = sphi 0, %s96
      %s111 = sphi 0, %s97
      %s115 = sphi 0, %s115
      %s117 = sphi 0, %s115
      %s118 = sphi 0, %s117
      %s132 = sphi 0, %s118
      %s136 = sphi 0, %s136
      %s138 = sphi 0, %s136
      %s139 = sphi 0, %s138
      %s153 = sphi 0, %s139
      %s157 = sphi 0, %s157
      %s159 = sphi 0, %s157
      %s160 = sphi 0, %s159
      %s174 = sphi 0, %s160
      %s178 = sphi 0, %s178
      %s180 = sphi 0, %s178
      %s181 = sphi 0, %s180
      %s195 = sphi 0, %s181
      %s199 = sphi 0, %s199
      %s201 = sphi 0, %s199
      %s202 = sphi 0, %s201
      %s216 = sphi 0, %s202
      %s222 = sphi 0, %s224
      %s225 = sphi 0, %s222
      %s226 = sphi 0, %s225
      %s242 = sphi 0, %s226
    $region4: #{encoder_forward.1} parent=1 // loop_header_branch
      %21 = sbr.rel (%p19) target = $region8
    $region5: #{encoder_forward.1} parent=1 // loop_body
      %s23 = ssub.s32 %s18, 1
      %s24 = ssub.s32 %s18, 2
      %s25 = sadd.s32 %s18, 1
      %s26 = ssub.s32 %s18, %s25
      %p27 = scmp.eq.s32.totalorder %s26, 0
      %s29 = sadd.s32 %s28, 1
      %s30 = scalar_select %p27, %s28, %s29
      %p33 = pneg %p27
      %p34 = scmp.eq.s32.totalorder %s18, 1
      %p35 = por %p33, %p34
      %p36 = scmp.ne.s32.totalorder %s28, %s31
      %p37 = scmp.eq.s32.totalorder %s18, 0
      %p38 = por %p36, %p37
      %p39 = scmp.ne.s32.totalorder %s28, %s31
      %p40 = scmp.eq.s32.totalorder %s23, 1
      %p41 = por %p39, %p40
      %p42 = scmp.ne.s32.totalorder %s31, %s32
      %p43 = scmp.eq.s32.totalorder %s23, 0
      %p44 = por %p42, %p43
      %p45 = scmp.ne.s32.totalorder %s31, %s32
      %p46 = scmp.eq.s32.totalorder %s24, 1
      %p47 = por %p45, %p46
      %p49 = scmp.ne.s32.totalorder %s32, %s48
      %p50 = scmp.eq.s32.totalorder %s24, 0
      %p51 = por %p49, %p50
      %s53 = sadd.s32 %s52, 1
      %p56 = scmp.eq.s32.totalorder %s18, 1
      %p57 = scmp.ne.s32.totalorder %s52, %s54
      %p58 = scmp.eq.s32.totalorder %s18, 0
      %p59 = por %p57, %p58
      %p60 = scmp.ne.s32.totalorder %s52, %s54
      %p61 = scmp.eq.s32.totalorder %s23, 1
      %p62 = por %p60, %p61
      %p63 = scmp.ne.s32.totalorder %s54, %s55
      %p64 = scmp.eq.s32.totalorder %s23, 0
      %p65 = por %p63, %p64
      %p66 = scmp.ne.s32.totalorder %s54, %s55
      %p67 = scmp.eq.s32.totalorder %s24, 1
      %p68 = por %p66, %p67
      %p70 = scmp.ne.s32.totalorder %s55, %s69
      %p71 = scmp.eq.s32.totalorder %s24, 0
      %p72 = por %p70, %p71
      %s74 = sadd.s32 %s73, 1
      %p77 = scmp.eq.s32.totalorder %s18, 1
      %p78 = scmp.ne.s32.totalorder %s73, %s75
      %p79 = scmp.eq.s32.totalorder %s18, 0
      %p80 = por %p78, %p79
      %p81 = scmp.ne.s32.totalorder %s73, %s75
      %p82 = scmp.eq.s32.totalorder %s23, 1
      %p83 = por %p81, %p82
      %p84 = scmp.ne.s32.totalorder %s75, %s76
      %p85 = scmp.eq.s32.totalorder %s23, 0
      %p86 = por %p84, %p85
      %p87 = scmp.ne.s32.totalorder %s75, %s76
      %p88 = scmp.eq.s32.totalorder %s24, 1
      %p89 = por %p87, %p88
      %p91 = scmp.ne.s32.totalorder %s76, %s90
      %p92 = scmp.eq.s32.totalorder %s24, 0
      %p93 = por %p91, %p92
      %s95 = sadd.s32 %s94, 1
      %p98 = scmp.eq.s32.totalorder %s18, 1
      %p99 = scmp.ne.s32.totalorder %s94, %s96
      %p100 = scmp.eq.s32.totalorder %s18, 0
      %p101 = por %p99, %p100
      %p102 = scmp.ne.s32.totalorder %s94, %s96
      %p103 = scmp.eq.s32.totalorder %s23, 1
      %p104 = por %p102, %p103
      %p105 = scmp.ne.s32.totalorder %s96, %s97
      %p106 = scmp.eq.s32.totalorder %s23, 0
      %p107 = por %p105, %p106
      %p108 = scmp.ne.s32.totalorder %s96, %s97
      %p109 = scmp.eq.s32.totalorder %s24, 1
      %p110 = por %p108, %p109
      %p112 = scmp.ne.s32.totalorder %s97, %s111
      %p113 = scmp.eq.s32.totalorder %s24, 0
      %p114 = por %p112, %p113
      %s116 = sadd.s32 %s115, 1
      %p119 = scmp.eq.s32.totalorder %s18, 1
      %p120 = scmp.ne.s32.totalorder %s115, %s117
      %p121 = scmp.eq.s32.totalorder %s18, 0
      %p122 = por %p120, %p121
      %p123 = scmp.ne.s32.totalorder %s115, %s117
      %p124 = scmp.eq.s32.totalorder %s23, 1
      %p125 = por %p123, %p124
      %p126 = scmp.ne.s32.totalorder %s117, %s118
      %p127 = scmp.eq.s32.totalorder %s23, 0
      %p128 = por %p126, %p127
      %p129 = scmp.ne.s32.totalorder %s117, %s118
      %p130 = scmp.eq.s32.totalorder %s24, 1
      %p131 = por %p129, %p130
      %p133 = scmp.ne.s32.totalorder %s118, %s132
      %p134 = scmp.eq.s32.totalorder %s24, 0
      %p135 = por %p133, %p134
      %s137 = sadd.s32 %s136, 1
      %p140 = scmp.eq.s32.totalorder %s18, 1
      %p141 = scmp.ne.s32.totalorder %s136, %s138
      %p142 = scmp.eq.s32.totalorder %s18, 0
      %p143 = por %p141, %p142
      %p144 = scmp.ne.s32.totalorder %s136, %s138
      %p145 = scmp.eq.s32.totalorder %s23, 1
      %p146 = por %p144, %p145
      %p147 = scmp.ne.s32.totalorder %s138, %s139
      %p148 = scmp.eq.s32.totalorder %s23, 0
      %p149 = por %p147, %p148
      %p150 = scmp.ne.s32.totalorder %s138, %s139
      %p151 = scmp.eq.s32.totalorder %s24, 1
      %p152 = por %p150, %p151
      %p154 = scmp.ne.s32.totalorder %s139, %s153
      %p155 = scmp.eq.s32.totalorder %s24, 0
      %p156 = por %p154, %p155
      %s158 = sadd.s32 %s157, 1
      %p161 = scmp.eq.s32.totalorder %s18, 1
      %p162 = scmp.ne.s32.totalorder %s157, %s159
      %p163 = scmp.eq.s32.totalorder %s18, 0
      %p164 = por %p162, %p163
      %p165 = scmp.ne.s32.totalorder %s157, %s159
      %p166 = scmp.eq.s32.totalorder %s23, 1
      %p167 = por %p165, %p166
      %p168 = scmp.ne.s32.totalorder %s159, %s160
      %p169 = scmp.eq.s32.totalorder %s23, 0
      %p170 = por %p168, %p169
      %p171 = scmp.ne.s32.totalorder %s159, %s160
      %p172 = scmp.eq.s32.totalorder %s24, 1
      %p173 = por %p171, %p172
      %p175 = scmp.ne.s32.totalorder %s160, %s174
      %p176 = scmp.eq.s32.totalorder %s24, 0
      %p177 = por %p175, %p176
      %s179 = sadd.s32 %s178, 1
      %p182 = scmp.eq.s32.totalorder %s18, 1
      %p183 = scmp.ne.s32.totalorder %s178, %s180
      %p184 = scmp.eq.s32.totalorder %s18, 0
      %p185 = por %p183, %p184
      %p186 = scmp.ne.s32.totalorder %s178, %s180
      %p187 = scmp.eq.s32.totalorder %s23, 1
      %p188 = por %p186, %p187
      %p189 = scmp.ne.s32.totalorder %s180, %s181
      %p190 = scmp.eq.s32.totalorder %s23, 0
      %p191 = por %p189, %p190
      %p192 = scmp.ne.s32.totalorder %s180, %s181
      %p193 = scmp.eq.s32.totalorder %s24, 1
      %p194 = por %p192, %p193
      %p196 = scmp.ne.s32.totalorder %s181, %s195
      %p197 = scmp.eq.s32.totalorder %s24, 0
      %p198 = por %p196, %p197
      %s200 = sadd.s32 %s199, 1
      %p203 = scmp.eq.s32.totalorder %s18, 1
      %p204 = scmp.ne.s32.totalorder %s199, %s201
      %p205 = scmp.eq.s32.totalorder %s18, 0
      %p206 = por %p204, %p205
      %p207 = scmp.ne.s32.totalorder %s199, %s201
      %p208 = scmp.eq.s32.totalorder %s23, 1
      %p209 = por %p207, %p208
      %p210 = scmp.ne.s32.totalorder %s201, %s202
      %p211 = scmp.eq.s32.totalorder %s23, 0
      %p212 = por %p210, %p211
      %p213 = scmp.ne.s32.totalorder %s201, %s202
      %p214 = scmp.eq.s32.totalorder %s24, 1
      %p215 = por %p213, %p214
      %p217 = scmp.ne.s32.totalorder %s202, %s216
      %p218 = scmp.eq.s32.totalorder %s24, 0
      %p219 = por %p217, %p218
      %s220 = ssub.s32 %s18, %s25
      %p221 = scmp.eq.s32.totalorder %s220, 0
      %s223 = sadd.s32 %s222, 1
      %s224 = scalar_select %p221, %s222, %s223
      %p227 = pneg %p221
      %p228 = scmp.eq.s32.totalorder %s18, 1
      %p229 = por %p227, %p228
      %p230 = scmp.ne.s32.totalorder %s222, %s225
      %p231 = scmp.eq.s32.totalorder %s18, 0
      %p232 = por %p230, %p231
      %p233 = scmp.ne.s32.totalorder %s222, %s225
      %p234 = scmp.eq.s32.totalorder %s23, 1
      %p235 = por %p233, %p234
      %p236 = scmp.ne.s32.totalorder %s225, %s226
      %p237 = scmp.eq.s32.totalorder %s23, 0
      %p238 = por %p236, %p237
      %p239 = scmp.ne.s32.totalorder %s225, %s226
      %p240 = scmp.eq.s32.totalorder %s24, 1
      %p241 = por %p239, %p240
      %p243 = scmp.ne.s32.totalorder %s226, %s242
      %p244 = scmp.eq.s32.totalorder %s24, 0
      %p245 = por %p243, %p244
      %p246 = scmp.le.s32.totalorder 1, %s18
      %p247 = scmp.lt.s32.totalorder %s18, 3
      %p248 = pnand %p246, %p247
      %p249 = pneg %p248
      // Predicated region
      $region9: #{encoder_forward.1} parent=5 // pred_check
        _
      $region10: #{encoder_forward.1} parent=5 // pred_check_branch
        %251 = sbr.rel (%p248) target = $region12
      $region11: #{encoder_forward.1} parent=5 // pred_region
        %s252 = ssub.s32 %s18, 1
        // Predicated region
        $region13: #{encoder_forward.1} parent=11 // pred_check
          %p253 = pneg %p65
        $region14: #{encoder_forward.1} parent=11 // pred_check_branch
          %255 = sbr.rel (%p253) target = $region16
        $region15: #{encoder_forward.1} parent=11 // pred_region
          _
        $region16: #{encoder_forward.1} parent=11 // pred_fallthru
          _
        // Predicated region
        $region17: #{encoder_forward.1} parent=11 // pred_check
          %p256 = pneg %p86
        $region18: #{encoder_forward.1} parent=11 // pred_check_branch
          %258 = sbr.rel (%p256) target = $region20
        $region19: #{encoder_forward.1} parent=11 // pred_region
          _
        $region20: #{encoder_forward.1} parent=11 // pred_fallthru
          _
        // Predicated region
        $region21: #{encoder_forward.1} parent=11 // pred_check
          %p259 = pneg %p107
        $region22: #{encoder_forward.1} parent=11 // pred_check_branch
          %261 = sbr.rel (%p259) target = $region24
        $region23: #{encoder_forward.1} parent=11 // pred_region
          _
        $region24: #{encoder_forward.1} parent=11 // pred_fallthru
          _
        // Predicated region
        $region25: #{encoder_forward.1} parent=11 // pred_check
          %p262 = pneg %p128
        $region26: #{encoder_forward.1} parent=11 // pred_check_branch
          %264 = sbr.rel (%p262) target = $region28
        $region27: #{encoder_forward.1} parent=11 // pred_region
          _
        $region28: #{encoder_forward.1} parent=11 // pred_fallthru
          _
        // Predicated region
        $region29: #{encoder_forward.1} parent=11 // pred_check
          %p265 = pneg %p149
        $region30: #{encoder_forward.1} parent=11 // pred_check_branch
          %267 = sbr.rel (%p265) target = $region32
        $region31: #{encoder_forward.1} parent=11 // pred_region
          _
        $region32: #{encoder_forward.1} parent=11 // pred_fallthru
          _
        // Predicated region
        $region33: #{encoder_forward.1} parent=11 // pred_check
          %p268 = pneg %p170
        $region34: #{encoder_forward.1} parent=11 // pred_check_branch
          %270 = sbr.rel (%p268) target = $region36
        $region35: #{encoder_forward.1} parent=11 // pred_region
          _
        $region36: #{encoder_forward.1} parent=11 // pred_fallthru
          _
        // Predicated region
        $region37: #{encoder_forward.1} parent=11 // pred_check
          %p271 = pneg %p191
        $region38: #{encoder_forward.1} parent=11 // pred_check_branch
          %273 = sbr.rel (%p271) target = $region40
        $region39: #{encoder_forward.1} parent=11 // pred_region
          _
        $region40: #{encoder_forward.1} parent=11 // pred_fallthru
          _
        // Predicated region
        $region41: #{encoder_forward.1} parent=11 // pred_check
          %p274 = pneg %p212
        $region42: #{encoder_forward.1} parent=11 // pred_check_branch
          %276 = sbr.rel (%p274) target = $region44
        $region43: #{encoder_forward.1} parent=11 // pred_region
          _
        $region44: #{encoder_forward.1} parent=11 // pred_fallthru
          _
      $region12: #{encoder_forward.1} parent=5 // pred_fallthru
        _
      %p277 = scmp.lt.s32.totalorder %s18, 2
      // Predicated region
      $region45: #{encoder_forward.1} parent=5 // pred_check
        %p278 = pneg %p277
      $region46: #{encoder_forward.1} parent=5 // pred_check_branch
        %280 = sbr.rel (%p278) target = $region48
      $region47: #{encoder_forward.1} parent=5 // pred_region
        // Predicated region
        $region49: #{encoder_forward.1} parent=47 // pred_check
          %p281 = pneg %p38
        $region50: #{encoder_forward.1} parent=47 // pred_check_branch
          %283 = sbr.rel (%p281) target = $region52
        $region51: #{encoder_forward.1} parent=47 // pred_region
          %p284 = scmp.lt.s32.totalorder %s18, 1
          %s285 = scalar_select %p284, %s18, 1
          %s286 = smul.addr %s285, 8
          %s287 = smul.addr %s286, 8
          %s288 = scalar_lea.vmem %s0, %s287
        $region52: #{encoder_forward.1} parent=47 // pred_fallthru
          _
      $region48: #{encoder_forward.1} parent=5 // pred_fallthru
        _
      %p289 = scmp.le.s32.totalorder 1, %s18
      %p290 = scmp.lt.s32.totalorder %s18, 3
      %p291 = pnand %p289, %p290
      %p292 = pneg %p291
      // Predicated region
      $region53: #{encoder_forward.1} parent=5 // pred_check
        _
      $region54: #{encoder_forward.1} parent=5 // pred_check_branch
        %294 = sbr.rel (%p291) target = $region56
      $region55: #{encoder_forward.1} parent=5 // pred_region
        %s295 = ssub.s32 %s18, 1
        %p296 = scmp.lt.s32.totalorder %s23, 1
        %s297 = scalar_select %p296, %s23, 1
        %s298 = smul.addr %s297, 8
        %s299 = smul.addr %s298, 8
        %s300 = scalar_lea.vmem %s0, %s299
        %p301 = pneg %p44
        %p302 = pneg %p41
        %p303 = pneg %p65
        %p304 = pneg %p62
        %p305 = pneg %p86
        %p306 = pneg %p83
        %p307 = pneg %p107
        %p308 = pneg %p104
        %p309 = pneg %p128
        %p310 = pneg %p125
        %p311 = pneg %p149
        %p312 = pneg %p146
        %p313 = pneg %p170
        %p314 = pneg %p167
        %p315 = pneg %p191
        %p316 = pneg %p188
        %p317 = pneg %p212
        %p318 = pneg %p209
        %p319 = pneg %p238
        %p320 = pneg %p235
        %s321 = sand.u32 %s225, 1
        %s322 = scalar_lea.sflag [#allocation6], %s321
        %s323 = sand.u32 %s225, 1
        %s324 = smul.addr %s323, 4
        %s325 = scalar_lea.vmem [#allocation5], %s324
        %p326 = scmp.lt.s32.totalorder %s23, 1
        %s327 = scalar_select %p326, %s23, 1
        %s328 = smul.addr %s327, 8
        %s329 = smul.addr %s328, 8
        %s330 = scalar_lea.vmem %s0, %s329
        %v331 = vld [vmem:[%s1] sm:$0xff]
        %v332 = vld [vmem:[%s1 + $0x8] sm:$0xff]
        %v333 = vld [vmem:[%s2] sm:$0x1]
        %v334 = vld [vmem:[%s330] ss:$4 sm:$0xff]
        %s335 = scalar_lea.vmem %s330, 32
        %v336 = vld [vmem:[%s335] ss:$4 sm:$0xff]
        %v338 = vperm.slane %v333, 0
        %vm340 = vcmask 130048
        %v342 = vsel %vm340, %v334, 0
        %v345 = vsel %vm340, %v336, 0
        %347 = vmatpush.msra.mxu0 0.0
        %348 = vmatpush.msra.mxu0 0.0
        %349 = vmatpush.msra.mxu0 0.0
        %350 = vmatpush.msra.mxu0 0.0
        %351 = vmatpush.msra.mxu0 0.0
        %352 = vmatpush.msra.mxu0 0.0
        %353 = vmatpush.msra.mxu0 0.0
        %354 = vmatpush.msra.mxu0 0.0
        %355 = vmatpush.msra.mxu0 0.0
        %356 = vmatpush.msra.mxu0 0.0
        %357 = vmatpush.msra.mxu0 0.0
        %358 = vmatpush.msra.mxu0 0.0
        %359 = vmatpush.msra.mxu0 0.0
        %360 = vmatpush.msra.mxu0 0.0
        %361 = vmatpush.msra.mxu0 %v332
        %362 = vmatpush.msra.mxu0 %v331
        %363 = vmatmul.f32.gmra.mxu0 %v342
        %v364 = vpop.f32.mrf.mxu0
        %v365 = vadd.f32 %v338, %v364
        %366 = vmatmul.f32.gmra.mxu0 %v345
        %v367 = vpop.f32.mrf.mxu0
        %v368 = vadd.f32 %v338, %v367
        %369 = vdwg.mxu0
        %v370 = vmax.f32 %v365, 0.0
        %v371 = vmax.f32 %v368, 0.0
        %vm372 = vcmask 261120
        %373 = vst.msk [vmem:[#allocation2] sm:$0xff] %vm372, %v370
        %374 = vst.msk [vmem:[#allocation2 + $0x8] sm:$0xff] %vm372, %v371
        %s375 = scalar_lea.vmem %s330, 1
        %v376 = vld [vmem:[%s375] ss:$4 sm:$0xff]
        %s377 = scalar_lea.vmem %s330, 33
        %v378 = vld [vmem:[%s377] ss:$4 sm:$0xff]
        %v380 = vsel %vm340, %v376, 0
        %v383 = vsel %vm340, %v378, 0
        %385 = vmatpush.msra.mxu0 0.0
        %386 = vmatpush.msra.mxu0 0.0
        %387 = vmatpush.msra.mxu0 0.0
        %388 = vmatpush.msra.mxu0 0.0
        %389 = vmatpush.msra.mxu0 0.0
        %390 = vmatpush.msra.mxu0 0.0
        %391 = vmatpush.msra.mxu0 0.0
        %392 = vmatpush.msra.mxu0 0.0
        %393 = vmatpush.msra.mxu0 0.0
        %394 = vmatpush.msra.mxu0 0.0
        %395 = vmatpush.msra.mxu0 0.0
        %396 = vmatpush.msra.mxu0 0.0
        %397 = vmatpush.msra.mxu0 0.0
        %398 = vmatpush.msra.mxu0 0.0
        %399 = vmatpush.msra.mxu0 %v332
        %400 = vmatpush.msra.mxu0 %v331
        %401 = vmatmul.f32.gmra.mxu0 %v380
        %v402 = vpop.f32.mrf.mxu0
        %v403 = vadd.f32 %v338, %v402
        %404 = vmatmul.f32.gmra.mxu0 %v383
        %v405 = vpop.f32.mrf.mxu0
        %v406 = vadd.f32 %v338, %v405
        %407 = vdwg.mxu0
        %v408 = vmax.f32 %v403, 0.0
        %v409 = vmax.f32 %v406, 0.0
        %412 = vrot.lane.b32.xlu0 %v408, 32
        %v413 = vpop.permute.xlu0 %412
        %414 = vrot.lane.b32.xlu0 %v409, 32
        %v415 = vpop.permute.xlu0 %414
        %vm418 = vcmask 523520
        %419 = vst.msk [vmem:[#allocation2] sm:$0xff] %vm418, %v413
        %420 = vst.msk [vmem:[#allocation2 + $0x8] sm:$0xff] %vm418, %v415
        %s421 = scalar_lea.vmem %s330, 2
        %v422 = vld [vmem:[%s421] ss:$4 sm:$0xff]
        %s423 = scalar_lea.vmem %s330, 34
        %v424 = vld [vmem:[%s423] ss:$4 sm:$0xff]
        %v426 = vsel %vm340, %v422, 0
        %v429 = vsel %vm340, %v424, 0
        %431 = vmatpush.msra.mxu0 0.0
        %432 = vmatpush.msra.mxu0 0.0
        %433 = vmatpush.msra.mxu0 0.0
        %434 = vmatpush.msra.mxu0 0.0
        %435 = vmatpush.msra.mxu0 0.0
        %436 = vmatpush.msra.mxu0 0.0
        %437 = vmatpush.msra.mxu0 0.0
        %438 = vmatpush.msra.mxu0 0.0
        %439 = vmatpush.msra.mxu0 0.0
        %440 = vmatpush.msra.mxu0 0.0
        %441 = vmatpush.msra.mxu0 0.0
        %442 = vmatpush.msra.mxu0 0.0
        %443 = vmatpush.msra.mxu0 0.0
        %444 = vmatpush.msra.mxu0 0.0
        %445 = vmatpush.msra.mxu0 %v332
        %446 = vmatpush.msra.mxu0 %v331
        %447 = vmatmul.f32.gmra.mxu0 %v426
        %v448 = vpop.f32.mrf.mxu0
        %v449 = vadd.f32 %v338, %v448
        %450 = vmatmul.f32.gmra.mxu0 %v429
        %v451 = vpop.f32.mrf.mxu0
        %v452 = vadd.f32 %v338, %v451
        %453 = vdwg.mxu0
        %v454 = vmax.f32 %v449, 0.0
        %v455 = vmax.f32 %v452, 0.0
        %458 = vrot.lane.b32.xlu0 %v454, 64
        %v459 = vpop.permute.xlu0 %458
        %460 = vrot.lane.b32.xlu0 %v455, 64
        %v461 = vpop.permute.xlu0 %460
        %vm464 = vcmask 785920
        %465 = vst.msk [vmem:[#allocation2] sm:$0xff] %vm464, %v459
        %466 = vst.msk [vmem:[#allocation2 + $0x8] sm:$0xff] %vm464, %v461
        %s467 = scalar_lea.vmem %s330, 3
        %v468 = vld [vmem:[%s467] ss:$4 sm:$0xff]
        %s469 = scalar_lea.vmem %s330, 35
        %v470 = vld [vmem:[%s469] ss:$4 sm:$0xff]
        %v472 = vsel %vm340, %v468, 0
        %v475 = vsel %vm340, %v470, 0
        %477 = vmatpush.msra.mxu0 0.0
        %478 = vmatpush.msra.mxu0 0.0
        %479 = vmatpush.msra.mxu0 0.0
        %480 = vmatpush.msra.mxu0 0.0
        %481 = vmatpush.msra.mxu0 0.0
        %482 = vmatpush.msra.mxu0 0.0
        %483 = vmatpush.msra.mxu0 0.0
        %484 = vmatpush.msra.mxu0 0.0
        %485 = vmatpush.msra.mxu0 0.0
        %486 = vmatpush.msra.mxu0 0.0
        %487 = vmatpush.msra.mxu0 0.0
        %488 = vmatpush.msra.mxu0 0.0
        %489 = vmatpush.msra.mxu0 0.0
        %490 = vmatpush.msra.mxu0 0.0
        %491 = vmatpush.msra.mxu0 %v332
        %492 = vmatpush.msra.mxu0 %v331
        %493 = vmatmul.f32.gmra.mxu0 %v472
        %v494 = vpop.f32.mrf.mxu0
        %v495 = vadd.f32 %v338, %v494
        %496 = vmatmul.f32.gmra.mxu0 %v475
        %v497 = vpop.f32.mrf.mxu0
        %v498 = vadd.f32 %v338, %v497
        %499 = vdwg.mxu0
        %v500 = vmax.f32 %v495, 0.0
        %v501 = vmax.f32 %v498, 0.0
        %504 = vrot.lane.b32.xlu0 %v500, 96
        %v505 = vpop.permute.xlu0 %504
        %506 = vrot.lane.b32.xlu0 %v501, 96
        %v507 = vpop.permute.xlu0 %506
        %vm510 = vcmask 1048320
        %511 = vst.msk [vmem:[#allocation2] sm:$0xff] %vm510, %v505
        %512 = vst.msk [vmem:[#allocation2 + $0x8] sm:$0xff] %vm510, %v507
        %v513 = vld [vmem:[%s3] sm:$0xff]
        %v514 = vld [vmem:[%s3 + $0x8] sm:$0xff]
        %v515 = vld [vmem:[%s3 + $0x10] sm:$0xff]
        %v516 = vld [vmem:[%s3 + $0x18] sm:$0xff]
        %v517 = vld [vmem:[%s3 + $0x20] sm:$0xff]
        %v518 = vld [vmem:[%s3 + $0x28] sm:$0xff]
        %v519 = vld [vmem:[%s3 + $0x30] sm:$0xff]
        %v520 = vld [vmem:[%s3 + $0x38] sm:$0xff]
        %v521 = vld [vmem:[%s3 + $0x40] sm:$0xff]
        %v522 = vld [vmem:[%s3 + $0x48] sm:$0xff]
        %v523 = vld [vmem:[%s3 + $0x50] sm:$0xff]
        %v524 = vld [vmem:[%s3 + $0x58] sm:$0xff]
        %v525 = vld [vmem:[%s3 + $0x60] sm:$0xff]
        %v526 = vld [vmem:[%s3 + $0x68] sm:$0xff]
        %v527 = vld [vmem:[%s3 + $0x70] sm:$0xff]
        %v528 = vld [vmem:[%s3 + $0x78] sm:$0xff]
        %v529 = vld [vmem:[%s4] sm:$0x1]
        %v530 = vld [vmem:[#allocation2] ss:$2 sm:$0xff]
        %v532 = vperm.slane %v529, 0
        %534 = vmatpush.msra.mxu0 %v528
        %535 = vmatpush.msra.mxu0 %v527
        %536 = vmatpush.msra.mxu0 %v526
        %537 = vmatpush.msra.mxu0 %v525
        %538 = vmatpush.msra.mxu0 %v524
        %539 = vmatpush.msra.mxu0 %v523
        %540 = vmatpush.msra.mxu0 %v522
        %541 = vmatpush.msra.mxu0 %v521
        %542 = vmatpush.msra.mxu0 %v520
        %543 = vmatpush.msra.mxu0 %v519
        %544 = vmatpush.msra.mxu0 %v518
        %545 = vmatpush.msra.mxu0 %v517
        %546 = vmatpush.msra.mxu0 %v516
        %547 = vmatpush.msra.mxu0 %v515
        %548 = vmatpush.msra.mxu0 %v514
        %549 = vmatpush.msra.mxu0 %v513
        %550 = vmatmul.f32.gmra.mxu0 %v530
        %v551 = vpop.f32.mrf.mxu0
        %v552 = vadd.f32 %v532, %v551
        %553 = vdwg.mxu0
        %v554 = vmax.f32 %v552, 0.0
        %555 = vst.msk [vmem:[#allocation3] sm:$0xff] %vm372, %v554
        %s556 = scalar_lea.vmem [#allocation2], 1
        %v557 = vld [vmem:[%s556] ss:$2 sm:$0xff]
        %558 = vmatpush.msra.mxu0 %v528
        %559 = vmatpush.msra.mxu0 %v527
        %560 = vmatpush.msra.mxu0 %v526
        %561 = vmatpush.msra.mxu0 %v525
        %562 = vmatpush.msra.mxu0 %v524
        %563 = vmatpush.msra.mxu0 %v523
        %564 = vmatpush.msra.mxu0 %v522
        %565 = vmatpush.msra.mxu0 %v521
        %566 = vmatpush.msra.mxu0 %v520
        %567 = vmatpush.msra.mxu0 %v519
        %568 = vmatpush.msra.mxu0 %v518
        %569 = vmatpush.msra.mxu0 %v517
        %570 = vmatpush.msra.mxu0 %v516
        %571 = vmatpush.msra.mxu0 %v515
        %572 = vmatpush.msra.mxu0 %v514
        %573 = vmatpush.msra.mxu0 %v513
        %574 = vmatmul.f32.gmra.mxu0 %v557
        %v575 = vpop.f32.mrf.mxu0
        %v576 = vadd.f32 %v532, %v575
        %577 = vdwg.mxu0
        %v578 = vmax.f32 %v576, 0.0
        %580 = vrot.lane.b32.xlu0 %v578, 32
        %v581 = vpop.permute.xlu0 %580
        %583 = vst.msk [vmem:[#allocation3] sm:$0xff] %vm418, %v581
        %v584 = vld [vmem:[%s5] sm:$0xff]
        %v585 = vld [vmem:[%s5 + $0x8] sm:$0xff]
        %v586 = vld [vmem:[%s5 + $0x10] sm:$0xff]
        %v587 = vld [vmem:[%s5 + $0x18] sm:$0xff]
        %v588 = vld [vmem:[%s5 + $0x20] sm:$0xff]
        %v589 = vld [vmem:[%s5 + $0x28] sm:$0xff]
        %v590 = vld [vmem:[%s5 + $0x30] sm:$0xff]
        %v591 = vld [vmem:[%s5 + $0x38] sm:$0xff]
        %v592 = vld [vmem:[%s6] sm:$0x1]
        %v593 = vld [vmem:[#allocation3] ss:$2 sm:$0xf]
        %v595 = vperm.slane %v592, 0
        %vm597 = vcmask 523264
        %v599 = vsel %vm597, %v593, 0
        %601 = vmatpush.msra.mxu0 0.0
        %602 = vmatpush.msra.mxu0 0.0
        %603 = vmatpush.msra.mxu0 0.0
        %604 = vmatpush.msra.mxu0 0.0
        %605 = vmatpush.msra.mxu0 0.0
        %606 = vmatpush.msra.mxu0 0.0
        %607 = vmatpush.msra.mxu0 0.0
        %608 = vmatpush.msra.mxu0 0.0
        %609 = vmatpush.msra.mxu0 %v591
        %610 = vmatpush.msra.mxu0 %v590
        %611 = vmatpush.msra.mxu0 %v589
        %612 = vmatpush.msra.mxu0 %v588
        %613 = vmatpush.msra.mxu0 %v587
        %614 = vmatpush.msra.mxu0 %v586
        %615 = vmatpush.msra.mxu0 %v585
        %616 = vmatpush.msra.mxu0 %v584
        %617 = vmatmul.f32.gmra.mxu0 %v599
        %v618 = vpop.f32.mrf.mxu0
        %v619 = vadd.f32 %v595, %v618
        %620 = vdwg.mxu0
        %v621 = vmax.f32 %v619, 0.0
        %vm622 = vcmask 257024
        %623 = vst.msk [vmem:[#allocation4] sm:$0xf] %vm622, %v621
        %s624 = scalar_lea.vmem [#allocation3], 1
        %v625 = vld [vmem:[%s624] ss:$2 sm:$0xf]
        %v627 = vsel %vm597, %v625, 0
        %629 = vmatpush.msra.mxu0 0.0
        %630 = vmatpush.msra.mxu0 0.0
        %631 = vmatpush.msra.mxu0 0.0
        %632 = vmatpush.msra.mxu0 0.0
        %633 = vmatpush.msra.mxu0 0.0
        %634 = vmatpush.msra.mxu0 0.0
        %635 = vmatpush.msra.mxu0 0.0
        %636 = vmatpush.msra.mxu0 0.0
        %637 = vmatpush.msra.mxu0 %v591
        %638 = vmatpush.msra.mxu0 %v590
        %639 = vmatpush.msra.mxu0 %v589
        %640 = vmatpush.msra.mxu0 %v588
        %641 = vmatpush.msra.mxu0 %v587
        %642 = vmatpush.msra.mxu0 %v586
        %643 = vmatpush.msra.mxu0 %v585
        %644 = vmatpush.msra.mxu0 %v584
        %645 = vmatmul.f32.gmra.mxu0 %v627
        %v646 = vpop.f32.mrf.mxu0
        %v647 = vadd.f32 %v595, %v646
        %648 = vdwg.mxu0
        %v649 = vmax.f32 %v647, 0.0
        %651 = vrot.lane.b32.xlu0 %v649, 32
        %v652 = vpop.permute.xlu0 %651
        %vm654 = vcmask 519424
        %655 = vst.msk [vmem:[#allocation4] sm:$0xf] %vm654, %v652
        %v656 = vld [vmem:[#allocation4] sm:$0xf]
        %v657 = vld [vmem:[%s7] sm:$0xff]
        %v658 = vld [vmem:[%s7 + $0x8] sm:$0xff]
        %v659 = vld [vmem:[%s7 + $0x10] sm:$0xff]
        %v660 = vld [vmem:[%s7 + $0x18] sm:$0xff]
        %v661 = vld [vmem:[%s7 + $0x20] sm:$0xff]
        %v662 = vld [vmem:[%s7 + $0x28] sm:$0xff]
        %v663 = vld [vmem:[%s7 + $0x30] sm:$0xff]
        %v664 = vld [vmem:[%s7 + $0x38] sm:$0xff]
        %v665 = vld [vmem:[%s8] sm:$0x1]
        %v667 = vperm.slane %v665, 0
        %v670 = vsel %vm597, %v656, 0
        %672 = vmatpush.msra.mxu0 0.0
        %673 = vmatpush.msra.mxu0 0.0
        %674 = vmatpush.msra.mxu0 0.0
        %675 = vmatpush.msra.mxu0 0.0
        %676 = vmatpush.msra.mxu0 0.0
        %677 = vmatpush.msra.mxu0 0.0
        %678 = vmatpush.msra.mxu0 0.0
        %679 = vmatpush.msra.mxu0 0.0
        %680 = vmatpush.msra.mxu0 %v664
        %681 = vmatpush.msra.mxu0 %v663
        %682 = vmatpush.msra.mxu0 %v662
        %683 = vmatpush.msra.mxu0 %v661
        %684 = vmatpush.msra.mxu0 %v660
        %685 = vmatpush.msra.mxu0 %v659
        %686 = vmatpush.msra.mxu0 %v658
        %687 = vmatpush.msra.mxu0 %v657
        %688 = vmatmul.f32.gmra.mxu0 %v670
        %v689 = vpop.f32.mrf.mxu0
        %v690 = vadd.f32 %v667, %v689
        %691 = vdwg.mxu0
        %v692 = vmax.f32 %v690, 0.0
        %vm693 = vcmask 125952
        %694 = vst.msk [vmem:[%s325] sm:$0xf] %vm693, %v692
        %s695 = sand.u32 %s225, 1
        %s696 = scalar_lea.sflag [#allocation6], %s695
        %s697 = sand.u32 %s225, 1
        %s698 = smul.addr %s697, 4
        %s699 = scalar_lea.vmem [#allocation5], %s698
        // Predicated region
        $region57: #{encoder_forward.1} parent=55 // pred_check
          %p700 = pneg %p235
        $region58: #{encoder_forward.1} parent=55 // pred_check_branch
          %702 = sbr.rel (%p700) target = $region60
        $region59: #{encoder_forward.1} parent=55 // pred_region
          %704 = vsyncadd %s696, 0
          %s705 = smul.addr %s23, 4
          %s706 = scalar_lea.hbm %s9, %s705
          %s708 = sshll.u32 %s699, 4
          %s709 = int_to_ptr.vmem [resolvable:$true] %s708
          %s710 = sshll.u32 %s706, 4
          %s711 = int_to_ptr.hbm [resolvable:$true] %s710
          %713 = dma.vmem_to_hbm [thread:$0]  %s709, 64, %s711, %s696
        $region60: #{encoder_forward.1} parent=55 // pred_fallthru
          _
      $region56: #{encoder_forward.1} parent=5 // pred_fallthru
        _
      %p714 = scmp.le.s32.totalorder 2, %s18
      // Predicated region
      $region61: #{encoder_forward.1} parent=5 // pred_check
        %p715 = pneg %p714
      $region62: #{encoder_forward.1} parent=5 // pred_check_branch
        %717 = sbr.rel (%p715) target = $region64
      $region63: #{encoder_forward.1} parent=5 // pred_region
        %s718 = ssub.s32 %s18, 2
        // Predicated region
        $region65: #{encoder_forward.1} parent=63 // pred_check
          %p719 = pneg %p241
        $region66: #{encoder_forward.1} parent=63 // pred_check_branch
          %721 = sbr.rel (%p719) target = $region68
        $region67: #{encoder_forward.1} parent=63 // pred_region
          %s722 = sand.u32 %s226, 1
          %s723 = scalar_lea.sflag [#allocation6], %s722
          %s724 = sand.u32 %s226, 1
          %s725 = smul.addr %s724, 4
          %s726 = scalar_lea.vmem [#allocation5], %s725
          %728 = dma.done %s723, 64
        $region68: #{encoder_forward.1} parent=63 // pred_fallthru
          _
      $region64: #{encoder_forward.1} parent=5 // pred_fallthru
        _
    $region6: #{encoder_forward.1} parent=1 // loop_footer
      %s22 = sadd.s32 1, %s18
    $region7: #{encoder_forward.1} parent=1 // loop_footer_branch
      %17 = sbr.rel target = $region3
    $region8: #{encoder_forward.1} parent=1 // loop_exit
      _
    %729 = vsyncpa [#allocation6], 1
    %s730 = scalar_lea.sflag [#allocation6], 1
    %731 = vsyncpa %s730, 1

</llo_original>
